<compile_context>
chip_gen: v7x
topology: tpu7x:2x2x1
jax: 0.10.0
libtpu: 0.0.40
codegen_flags: <defaults>
</compile_context>

<pallas_src>
import math

import jax
import jax.numpy as jnp
from jax.experimental import pallas as pl
from jax.experimental.pallas import tpu as pltpu

LANE = 128  # TPU vreg lane width


def _make_sum_kernel(n, weighted):
    """Build the kernel for a static number of inputs `n`."""
    if weighted:
        def kernel(scale_ref, *refs):            # scale_ref: SMEM (n,) f32
            x_refs, o_ref = refs[:n], refs[n]    # x_i: (TM, 128); o: (TM, 128)
            acc = x_refs[0][...]                 # x[0] is never scaled
            for i in range(1, n):                # static unroll, n is tiny
                acc = acc + x_refs[i][...] * scale_ref[i]
            o_ref[...] = acc.astype(o_ref.dtype)
    else:
        def kernel(*refs):
            x_refs, o_ref = refs[:n], refs[n]
            acc = x_refs[0][...]
            for i in range(1, n):
                acc = acc + x_refs[i][...]
            o_ref[...] = acc.astype(o_ref.dtype)
    return kernel


def pallas_sum(xs, w_param=None):
    """Pallas equivalent of Sum.forward.

    xs      : sequence of n equally-shaped arrays.
    w_param : None (weight=False) or the (n-1,) learnable parameter; the
              sigmoid(w)*2 scaling is applied to xs[1:], matching PyTorch.
    """
    xs = [jnp.asarray(x) for x in xs]
    n = len(xs)
    if n == 1:
        return xs[0]
    shape, dtype = xs[0].shape, xs[0].dtype
    T = math.prod(shape)

    # ---- lane-dense 2D layout: (rows, 128), rows padded to the tile size ----
    R = pl.cdiv(T, LANE)
    R8 = pl.cdiv(R, 8) * 8
    bytes_per_row = LANE * jnp.dtype(dtype).itemsize
    # keep double-buffered (n inputs + 1 output) tiles under ~16 MiB of VMEM
    max_tm = (16 * 1024 * 1024) // ((n + 1) * 2 * bytes_per_row)
    TM = max(8, min(R8, 1024, (max_tm // 8) * 8))
    R_pad = pl.cdiv(R8, TM) * TM
    T_pad = R_pad * LANE

    def to_lane_dense(x):
        xf = x.reshape(-1)
        if T_pad != T:
            xf = jnp.pad(xf, (0, T_pad - T))
        return xf.reshape(R_pad, LANE)

    args = [to_lane_dense(x) for x in xs]
    tile = pl.BlockSpec((TM, LANE), lambda i: (i, 0))
    in_specs = [tile] * n

    weighted = w_param is not None
    if weighted:
        scale = jax.nn.sigmoid(jnp.asarray(w_param, jnp.float32)) * 2.0
        # prepend a dummy 1.0 so scale[i] is the weight for xs[i] (i >= 1)
        scale = jnp.concatenate([jnp.ones((1,), jnp.float32), scale])
        args = [scale] + args
        in_specs = [pl.BlockSpec(memory_space=pltpu.MemorySpace.SMEM)] + in_specs

    out = pl.pallas_call(
        _make_sum_kernel(n, weighted),
        out_shape=jax.ShapeDtypeStruct((R_pad, LANE), dtype),
        grid=(R_pad // TM,),
        in_specs=in_specs,
        out_specs=tile,
        compiler_params=pltpu.CompilerParams(
            dimension_semantics=("parallel",)),
    )(*args)

    y = out.reshape(-1)
    if T_pad != T:
        y = y[:T]
    return y.reshape(shape)


if __name__ == "__main__":
    # Small shapes consistent with the module: n=3 feature maps of
    # (batch=2, channels=4, spatial=16x16).
    n = 3
    B, C, H, W = 2, 4, 16, 16

    key = jax.random.PRNGKey(0)
    keys = jax.random.split(key, n)
    xs = tuple(jax.random.normal(keys[i], (B, C, H, W), dtype=jnp.float32)
               for i in range(n))
    # PyTorch init: self.w = -torch.arange(1.0, n) / 2
    w_param = -jnp.arange(1.0, n, dtype=jnp.float32) / 2.0

    y_weighted = pallas_sum(xs, w_param)      # Sum(n, weight=True)
    y_plain = pallas_sum(xs, None)            # Sum(n, weight=False)
    jax.block_until_ready((y_weighted, y_plain))

    # Plain-JAX references (same op ordering as the PyTorch forward).
    scale = jax.nn.sigmoid(w_param) * 2.0
    ref_w = xs[0]
    for i in range(n - 1):
        ref_w = ref_w + xs[i + 1] * scale[i]
    ref_p = xs[0]
    for i in range(n - 1):
        ref_p = ref_p + xs[i + 1]

    assert y_weighted.shape == ref_w.shape and y_weighted.dtype == ref_w.dtype
    assert jnp.allclose(y_weighted, ref_w, atol=1e-5, rtol=1e-5)
    assert jnp.allclose(y_plain, ref_p, atol=1e-6, rtol=1e-6)

    print("KERNEL_OK")
</pallas_src>

<mosaic_0001>
module attributes {stable_mosaic.version = 11 : i64} {
  func.func @kernel(%arg0: i32, %arg1: memref<3xf32, #tpu.memory_space<smem>>, %arg2: memref<16x128xf32, #tpu.memory_space<vmem>>, %arg3: memref<16x128xf32, #tpu.memory_space<vmem>>, %arg4: memref<16x128xf32, #tpu.memory_space<vmem>>, %arg5: memref<16x128xf32, #tpu.memory_space<vmem>>) attributes {dimension_semantics = [#tpu.dimension_semantics<parallel>], iteration_bounds = array<i64: 1>, scalar_prefetch = 0 : i64, scratch_operands = 0 : i64, tpu.core_type = #tpu.core_type<tc>, window_params = [{transform_indices = @transform_0, window_bounds = array<i64: 3>}, {transform_indices = @transform_1, window_bounds = array<i64: 16, 128>}, {transform_indices = @transform_2, window_bounds = array<i64: 16, 128>}, {transform_indices = @transform_3, window_bounds = array<i64: 16, 128>}, {transform_indices = @transform_4, window_bounds = array<i64: 16, 128>}]} {
    %c0 = arith.constant 0 : index
    %c0_0 = arith.constant 0 : index
    %0 = vector.load %arg2[%c0, %c0_0] : memref<16x128xf32, #tpu.memory_space<vmem>>, vector<16x128xf32>
    %c0_1 = arith.constant 0 : index
    %c0_2 = arith.constant 0 : index
    %1 = vector.load %arg3[%c0_1, %c0_2] : memref<16x128xf32, #tpu.memory_space<vmem>>, vector<16x128xf32>
    %c1 = arith.constant 1 : index
    %2 = memref.load %arg1[%c1] : memref<3xf32, #tpu.memory_space<smem>>
    %3 = vector.broadcast %2 : f32 to vector<16x128xf32>
    %4 = arith.mulf %1, %3 : vector<16x128xf32>
    %5 = arith.addf %0, %4 : vector<16x128xf32>
    %c0_3 = arith.constant 0 : index
    %c0_4 = arith.constant 0 : index
    %6 = vector.load %arg4[%c0_3, %c0_4] : memref<16x128xf32, #tpu.memory_space<vmem>>, vector<16x128xf32>
    %c2 = arith.constant 2 : index
    %7 = memref.load %arg1[%c2] : memref<3xf32, #tpu.memory_space<smem>>
    %8 = vector.broadcast %7 : f32 to vector<16x128xf32>
    %9 = arith.mulf %6, %8 : vector<16x128xf32>
    %10 = arith.addf %5, %9 : vector<16x128xf32>
    %c0_5 = arith.constant 0 : index
    %c0_6 = arith.constant 0 : index
    %11 = vector.load %arg5[%c0_5, %c0_6] : memref<16x128xf32, #tpu.memory_space<vmem>>, vector<16x128xf32>
    tpu.vector_store %arg5[%c0_5, %c0_6], %10 {strides = array<i32>} : memref<16x128xf32, #tpu.memory_space<vmem>>, vector<16x128xf32>,
    return
  }
  func.func @transform_0(%arg0: i32) -> i32 {
    %c0_i32 = arith.constant 0 : i32
    %c0_i32_0 = arith.constant 0 : i32
    return %c0_i32 : i32
  }
  func.func @transform_1(%arg0: i32) -> (i32, i32) {
    %c0_i32 = arith.constant 0 : i32
    %c0_i32_0 = arith.constant 0 : i32
    return %arg0, %c0_i32 : i32, i32
  }
  func.func @transform_2(%arg0: i32) -> (i32, i32) {
    %c0_i32 = arith.constant 0 : i32
    %c0_i32_0 = arith.constant 0 : i32
    return %arg0, %c0_i32 : i32, i32
  }
  func.func @transform_3(%arg0: i32) -> (i32, i32) {
    %c0_i32 = arith.constant 0 : i32
    %c0_i32_0 = arith.constant 0 : i32
    return %arg0, %c0_i32 : i32, i32
  }
  func.func @transform_4(%arg0: i32) -> (i32, i32) {
    %c0_i32 = arith.constant 0 : i32
    %c0_i32_0 = arith.constant 0 : i32
    return %arg0, %c0_i32 : i32, i32
  }
}

</mosaic_0001>

<llo_original>
// kernel: tpu_custom_call.1
$region0: #{tpu_custom_call.1}
  #allocation0 [shape = 'u32[]', space=smem, size = 0x4, offset = 0x4, fixed_abs, tag = 'smem constant byte address 0x4 - core index']
  #allocation1 [shape = 'u32[144,128]{1,0:T(1,128)}', space=vmem, size = 0x12000, scoped, tag = 'internal scratch']
  %s0 = inlined_call_operand.hbm [shape: f32[3], index: 0, kind: input, shape index: {}]
  %s1 = inlined_call_operand.hbm [shape: f32[16,128], index: 1, kind: input, shape index: {}]
  %s2 = inlined_call_operand.hbm [shape: f32[16,128], index: 2, kind: input, shape index: {}]
  %s3 = inlined_call_operand.hbm [shape: f32[16,128], index: 3, kind: input, shape index: {}]
  %s4 = inlined_call_operand.hbm [shape: f32[16,128], index: 4, kind: output, shape index: {}]
  %s5 = sld [smem:[#allocation0]]
  $region42: #{tpu_custom_call.1} parent=0
    _
  %s7 = ssub.s32 1, %s5
  %s8 = scalar_select 0, %s7, %s5
  $region1: #{tpu_custom_call.1} parent=0
    #allocation2 [shape = 'u8[512]{0}', space=smem, size = 0x200, scoped, tag = 'input window, operand 0, single buffered']
    #allocation3 [shape = 's32[1]{0}', space=sflag, size = 0x4, scoped, tag = 'scoped memory for tpu_custom_call.1']
    #allocation4 [shape = 's32[1]{0}', space=sflag, size = 0x4, scoped, tag = 'scoped memory for tpu_custom_call.1']
    #allocation5 [shape = 's32[1]{0}', space=sflag, size = 0x4, scoped, tag = 'scoped memory for tpu_custom_call.1']
    #allocation6 [shape = 'u8[8192]{0}', space=vmem, size = 0x2000, scoped, tag = 'input window, operand 1, single buffered']
    #allocation7 [shape = 'u8[8192]{0}', space=vmem, size = 0x2000, scoped, tag = 'input window, operand 2, single buffered']
    #allocation8 [shape = 's32[1]{0}', space=sflag, size = 0x4, scoped, tag = 'scoped memory for tpu_custom_call.1']
    #allocation9 [shape = 'u8[8192]{0}', space=vmem, size = 0x2000, scoped, tag = 'input window, operand 3, single buffered']
    #allocation10 [shape = 'u8[8192]{0}', space=vmem, size = 0x2000, scoped, tag = 'output window, operand 0, single buffered']
    %9 = vsyncpa [#allocation5], 0
    %10 = vsyncpa [#allocation3], 0
    %11 = vsyncpa [#allocation8], 0
    %12 = vsyncpa [#allocation4], 0
    // Predicated region
    $region2: #{tpu_custom_call.1} parent=1 // pred_check
      _
    $region3: #{tpu_custom_call.1} parent=1 // pred_check_branch
      %14 = sbr.rel (0) target = $region5
    $region4: #{tpu_custom_call.1} parent=1 // pred_region
      %s16 = ssub.s32 16, 16
      %17 = vsyncadd [#allocation5], %s16
      %20 = dma.hbm_to_smem %s0, 16, [#allocation2], [#allocation5]
    $region5: #{tpu_custom_call.1} parent=1 // pred_fallthru
      _
    // Predicated region
    $region6: #{tpu_custom_call.1} parent=1 // pred_check
      _
    $region7: #{tpu_custom_call.1} parent=1 // pred_check_branch
      %22 = sbr.rel (0) target = $region9
    $region8: #{tpu_custom_call.1} parent=1 // pred_region
      %s24 = ssub.s32 256, 256
      %25 = vsyncadd [#allocation3], %s24
      %s26 = sshll.u32 [#allocation6], 4
      %s27 = int_to_ptr.vmem [resolvable:$true] %s26
      %32 = dma.hbm_to_vmem [thread:$0]  %s1, 256, %s27, [#allocation3], 128, 128, 8
    $region9: #{tpu_custom_call.1} parent=1 // pred_fallthru
      _
    // Predicated region
    $region10: #{tpu_custom_call.1} parent=1 // pred_check
      _
    $region11: #{tpu_custom_call.1} parent=1 // pred_check_branch
      %34 = sbr.rel (0) target = $region13
    $region12: #{tpu_custom_call.1} parent=1 // pred_region
      %s36 = ssub.s32 256, 256
      %37 = vsyncadd [#allocation8], %s36
      %s38 = sshll.u32 [#allocation7], 4
      %s39 = int_to_ptr.vmem [resolvable:$true] %s38
      %44 = dma.hbm_to_vmem [thread:$0]  %s2, 256, %s39, [#allocation8], 128, 128, 8
    $region13: #{tpu_custom_call.1} parent=1 // pred_fallthru
      _
    // Predicated region
    $region14: #{tpu_custom_call.1} parent=1 // pred_check
      _
    $region15: #{tpu_custom_call.1} parent=1 // pred_check_branch
      %46 = sbr.rel (0) target = $region17
    $region16: #{tpu_custom_call.1} parent=1 // pred_region
      %s48 = ssub.s32 256, 256
      %49 = vsyncadd [#allocation8], %s48
      %s50 = sshll.u32 [#allocation9], 4
      %s51 = int_to_ptr.vmem [resolvable:$true] %s50
      %56 = dma.hbm_to_vmem [thread:$0]  %s3, 256, %s51, [#allocation8], 128, 128, 8
    $region17: #{tpu_custom_call.1} parent=1 // pred_fallthru
      _
    // Predicated region
    $region18: #{tpu_custom_call.1} parent=1 // pred_check
      _
    $region19: #{tpu_custom_call.1} parent=1 // pred_check_branch
      %58 = sbr.rel (0) target = $region21
    $region20: #{tpu_custom_call.1} parent=1 // pred_region
      %59 = dma.done [#allocation5], 16
    $region21: #{tpu_custom_call.1} parent=1 // pred_fallthru
      _
    // Predicated region
    $region22: #{tpu_custom_call.1} parent=1 // pred_check
      _
    $region23: #{tpu_custom_call.1} parent=1 // pred_check_branch
      %61 = sbr.rel (0) target = $region25
    $region24: #{tpu_custom_call.1} parent=1 // pred_region
      %62 = dma.done [#allocation3], 256
    $region25: #{tpu_custom_call.1} parent=1 // pred_fallthru
      _
    // Predicated region
    $region26: #{tpu_custom_call.1} parent=1 // pred_check
      _
    $region27: #{tpu_custom_call.1} parent=1 // pred_check_branch
      %64 = sbr.rel (0) target = $region29
    $region28: #{tpu_custom_call.1} parent=1 // pred_region
      %65 = dma.done [#allocation8], 256
    $region29: #{tpu_custom_call.1} parent=1 // pred_fallthru
      _
    // Predicated region
    $region30: #{tpu_custom_call.1} parent=1 // pred_check
      _
    $region31: #{tpu_custom_call.1} parent=1 // pred_check_branch
      %67 = sbr.rel (0) target = $region33
    $region32: #{tpu_custom_call.1} parent=1 // pred_region
      %68 = dma.done [#allocation8], 256
    $region33: #{tpu_custom_call.1} parent=1 // pred_fallthru
      _
    %69 = sfence
    %v70 = vld [vmem:[#allocation6] sm:$0xff]
    %v71 = vld [vmem:[#allocation6 + $0x8] sm:$0xff]
    %v72 = vld [vmem:[#allocation7] sm:$0xff]
    %v73 = vld [vmem:[#allocation7 + $0x8] sm:$0xff]
    %s74 = sld [smem:[#allocation2 + $0x1]]
    %v75 = vstv %s74
    %v76 = vmul.f32 %v72, %v75
    %v77 = vmul.f32 %v73, %v75
    %v78 = vadd.f32 %v70, %v76
    %v79 = vadd.f32 %v71, %v77
    %v80 = vld [vmem:[#allocation9] sm:$0xff]
    %v81 = vld [vmem:[#allocation9 + $0x8] sm:$0xff]
    %s82 = sld [smem:[#allocation2 + $0x2]]
    %v83 = vstv %s82
    %v84 = vmul.f32 %v80, %v83
    %v85 = vmul.f32 %v81, %v83
    %v86 = vadd.f32 %v78, %v84
    %v87 = vadd.f32 %v79, %v85
    %88 = vst [vmem:[#allocation10] sm:$0xff] %v86
    %89 = vst [vmem:[#allocation10 + $0x8] sm:$0xff] %v87
    // Predicated region
    $region34: #{tpu_custom_call.1} parent=1 // pred_check
      _
    $region35: #{tpu_custom_call.1} parent=1 // pred_check_branch
      %91 = sbr.rel (0) target = $region37
    $region36: #{tpu_custom_call.1} parent=1 // pred_region
      %s93 = ssub.s32 256, 256
      %94 = vsyncadd [#allocation4], %s93
      %s95 = sshll.u32 [#allocation10], 4
      %s96 = int_to_ptr.vmem [resolvable:$true] %s95
      %101 = dma.vmem_to_hbm [thread:$0]  %s96, 256, %s4, [#allocation4], 128, 128, 8
    $region37: #{tpu_custom_call.1} parent=1 // pred_fallthru
      _
    // Predicated region
    $region38: #{tpu_custom_call.1} parent=1 // pred_check
      _
    $region39: #{tpu_custom_call.1} parent=1 // pred_check_branch
      %103 = sbr.rel (0) target = $region41
    $region40: #{tpu_custom_call.1} parent=1 // pred_region
      %104 = dma.done [#allocation4], 256
    $region41: #{tpu_custom_call.1} parent=1 // pred_fallthru
      _
    %105 = vsyncpa [#allocation3], 1
    %106 = vsyncpa [#allocation8], 1
    %107 = vsyncpa [#allocation4], 1
    %108 = vsyncpa [#allocation5], 1

</llo_original>
